<compile_context>
chip_gen: v6e
topology: v6e:2x2x1
jax: 0.10.0
libtpu: 0.0.40
codegen_flags: <defaults>
</compile_context>

<pallas_src>
import functools
import math

import jax
import jax.numpy as jnp
from jax.experimental import pallas as pl
from jax.experimental.pallas import tpu as pltpu

_EPS = 1e-12            # torch.nn.functional.normalize default eps
_EPS_SQ = _EPS * _EPS   # max(sqrt(s), eps) == sqrt(max(s, eps**2))


def _cosine_loss_kernel(*refs, n_packed, tile_rows, tiles_per_core, packed):
    if packed:
        seg_ref, x_ref, y_ref, o_ref = refs
    else:
        x_ref, y_ref, o_ref = refs
        seg_ref = None

    c = pl.program_id(0)   # TensorCore split axis ("parallel")
    i = pl.program_id(1)   # row-tile reduction axis ("arbitrary")

    @pl.when(i == 0)
    def _init():
        o_ref[...] = jnp.zeros_like(o_ref)

    x = x_ref[...].astype(jnp.float32)   # (tile_rows, d_packed)
    y = y_ref[...].astype(jnp.float32)

    if packed:
        seg = seg_ref[...]               # (d_packed, rp) 0/1, exact in bf16

        def row_sum(p):                  # (T, rp*D) -> (T, rp) segmented per D lanes
            # hi/lo bf16 split of the f32 products: 2 MXU passes per matmul instead
            # of the 6+ of an f32xf32 HIGHEST matmul; error ~2^-16 relative.
            p_hi = p.astype(jnp.bfloat16)
            p_lo = (p - p_hi.astype(jnp.float32)).astype(jnp.bfloat16)
            return (jnp.dot(p_hi, seg, preferred_element_type=jnp.float32)
                    + jnp.dot(p_lo, seg, preferred_element_type=jnp.float32))
    else:

        def row_sum(p):                  # (T, D) -> (T, 1)
            return jnp.sum(p, axis=-1, keepdims=True)

    dot = row_sum(x * y)
    ssx = row_sum(x * x)
    ssy = row_sum(y * y)

    # cos = dot / (max(||x||,eps) * max(||y||,eps)), via rsqrt on the EUP.
    cos = (dot
           * jax.lax.rsqrt(jnp.maximum(ssx, _EPS_SQ))
           * jax.lax.rsqrt(jnp.maximum(ssy, _EPS_SQ)))

    # Virtual (unclamped) tile start; it overshoots n_packed only on the partial
    # last tile or the duplicated tile read by the second core split.
    tile_start = (c * tiles_per_core + i) * tile_rows
    needs_mask = tile_start + tile_rows > n_packed

    @pl.when(jnp.logical_not(needs_mask))
    def _interior():                     # steady state: no mask work at all
        o_ref[...] += jnp.sum(cos)

    @pl.when(needs_mask)
    def _boundary():                     # boundary/duplicate tiles only
        row_ids = jax.lax.broadcasted_iota(jnp.int32, cos.shape, 0)
        ok = (tile_start + row_ids) < n_packed
        o_ref[...] += jnp.sum(jnp.where(ok, cos, 0.0))


def cosine_loss(outputs, targets, *, target_block_bytes=2 << 20):
    """Pallas implementation of CosineLoss.forward; returns a float32 scalar."""
    assert outputs.shape == targets.shape, "outputs/targets shape mismatch"
    d = outputs.shape[-1]
    x = outputs.reshape(-1, d)
    y = targets.reshape(-1, d)
    n = x.shape[0]

    # ---- Lane-dense packing for small feature dims --------------------------
    # (N, D) -> (N/rp, rp*D) with rp*D a multiple of 128; pad N with zero rows up
    # to a multiple of rp.  Zero rows contribute cos == 0 exactly.
    rp = 1
    if d < 128:
        rp = 128 // math.gcd(d, 128)
    seg = None
    if rp > 1:
        n_pad = -(-n // rp) * rp
        if n_pad != n:
            pad = n_pad - n
            x = jnp.concatenate([x, jnp.zeros((pad, d), x.dtype)], axis=0)
            y = jnp.concatenate([y, jnp.zeros((pad, d), y.dtype)], axis=0)
        n_packed = n_pad // rp
        d_packed = rp * d
        x = x.reshape(n_packed, d_packed)
        y = y.reshape(n_packed, d_packed)
        lane = jnp.arange(d_packed, dtype=jnp.int32)[:, None]
        grp = jnp.arange(rp, dtype=jnp.int32)[None, :]
        seg = ((lane // d) == grp).astype(jnp.bfloat16)   # 0/1 segment matrix
    else:
        n_packed, d_packed = n, d

    # ---- Row-tile size: big blocks, kernel is HBM-bandwidth bound -----------
    itemsize = jnp.dtype(x.dtype).itemsize           # bf16 inputs stay bf16 in HBM/VMEM
    d_vmem = -(-d_packed // 128) * 128                # lane-padded width in VMEM
    tile_rows = max(8, (target_block_bytes // (d_vmem * itemsize)) // 8 * 8)
    tile_rows = min(tile_rows, n_packed)              # (8,128) rule: mult-of-8 or full dim
    # TODO(synk): feature dims so large that one row exceeds the block budget would
    # additionally need feature-axis tiling (2-level reduction); not needed here.

    num_tiles = pl.cdiv(n_packed, tile_rows)
    # 2-way split across v7x TensorCores; skipped for a single tile.  On 1-TC chips
    # it costs at most one duplicated, fully-masked tile when num_tiles is odd.
    n_splits = 2 if num_tiles >= 2 else 1
    tiles_per_core = pl.cdiv(num_tiles, n_splits)
    grid = (n_splits, tiles_per_core)

    def in_map(c, i):
        # Clamp so the possible extra tile of the second core re-reads a valid
        # block; its contribution is masked to zero inside the kernel.
        return (jnp.minimum(c * tiles_per_core + i, num_tiles - 1), 0)

    kernel = functools.partial(
        _cosine_loss_kernel,
        n_packed=n_packed,
        tile_rows=tile_rows,
        tiles_per_core=tiles_per_core,
        packed=rp > 1,
    )

    row_spec = pl.BlockSpec((tile_rows, d_packed), in_map)
    in_specs = [row_spec, row_spec]
    operands = [x, y]
    if rp > 1:
        in_specs = [pl.BlockSpec((d_packed, rp), lambda c, i: (0, 0))] + in_specs
        operands = [seg] + operands

    partials = pl.pallas_call(
        kernel,
        out_shape=jax.ShapeDtypeStruct((n_splits, 1, 1), jnp.float32),
        grid_spec=pltpu.PrefetchScalarGridSpec(
            num_scalar_prefetch=0,
            grid=grid,
            in_specs=in_specs,
            out_specs=pl.BlockSpec((1, 1, 1), lambda c, i: (c, 0, 0)),
        ),
        compiler_params=pltpu.CompilerParams(
            dimension_semantics=("parallel", "arbitrary"),
            vmem_limit_bytes=48 * 1024 * 1024,
        ),
    )(*operands)

    # Kernel accumulates sum(cos) over the real rows -> mean(2 - 2*cos).
    return 2.0 - 2.0 * (jnp.sum(partials) / jnp.float32(n))


def _reference(o, t):
    o = o.astype(jnp.float32)
    t = t.astype(jnp.float32)
    on = o / jnp.maximum(jnp.linalg.norm(o, axis=-1, keepdims=True), _EPS)
    tn = t / jnp.maximum(jnp.linalg.norm(t, axis=-1, keepdims=True), _EPS)
    return jnp.mean(2.0 - 2.0 * jnp.sum(on * tn, axis=-1))


if __name__ == "__main__":
    key = jax.random.PRNGKey(0)
    k1, k2, k3, k4, k5, k6, k7, k8 = jax.random.split(key, 8)

    # Primary case: (batch=2, seq=8, hidden=32) -> normalize over hidden, mean over
    # 16 rows.  Exercises the lane-packed (rp=4) MXU segmented-reduce path.
    outputs = jax.random.normal(k1, (2, 8, 32), dtype=jnp.float32)
    targets = jax.random.normal(k2, (2, 8, 32), dtype=jnp.float32)
    loss = jax.block_until_ready(cosine_loss(outputs, targets))
    ref = _reference(outputs, targets)
    assert jnp.allclose(loss, ref, atol=5e-5, rtol=5e-5), (loss, ref)

    # D = 40 (does not divide 128): packed with rp=16 plus zero-row padding.
    o2 = jax.random.normal(k3, (3, 40), dtype=jnp.float32)
    t2 = jax.random.normal(k4, (3, 40), dtype=jnp.float32)
    loss2 = jax.block_until_ready(cosine_loss(o2, t2))
    ref2 = _reference(o2, t2)
    assert jnp.allclose(loss2, ref2, atol=5e-5, rtol=5e-5), (loss2, ref2)

    # D >= 128: unpacked lane-reduce path.
    o3 = jax.random.normal(k5, (24, 256), dtype=jnp.float32)
    t3 = jax.random.normal(k6, (24, 256), dtype=jnp.float32)
    loss3 = jax.block_until_ready(cosine_loss(o3, t3))
    ref3 = _reference(o3, t3)
    assert jnp.allclose(loss3, ref3, atol=5e-5, rtol=5e-5), (loss3, ref3)

    # Multi-tile + 2-way core split + boundary masking (small block override).
    o4 = jax.random.normal(k7, (4, 50, 32), dtype=jnp.float32)
    t4 = jax.random.normal(k8, (4, 50, 32), dtype=jnp.float32)
    loss4 = jax.block_until_ready(cosine_loss(o4, t4, target_block_bytes=4096))
    ref4 = _reference(o4, t4)
    assert jnp.allclose(loss4, ref4, atol=5e-5, rtol=5e-5), (loss4, ref4)

    print("KERNEL_OK")
</pallas_src>

<mosaic_0001>
module attributes {stable_mosaic.version = 11 : i64} {
  func.func @_cosine_loss_kernel(%arg0: i32, %arg1: i32, %arg2: memref<128x4xbf16, #tpu.memory_space<vmem>>, %arg3: memref<4x128xf32, #tpu.memory_space<vmem>>, %arg4: memref<4x128xf32, #tpu.memory_space<vmem>>, %arg5: memref<1x1x1xf32, #tpu.memory_space<vmem>>) attributes {dimension_semantics = [#tpu.dimension_semantics<parallel>, #tpu.dimension_semantics<arbitrary>], iteration_bounds = array<i64: 1, 1>, scalar_prefetch = 0 : i64, scratch_operands = 0 : i64, tpu.core_type = #tpu.core_type<tc>, window_params = [{pipeline_mode = #tpu.pipeline_mode<synchronous>, transform_indices = @transform_0, window_bounds = array<i64: 128, 4>}, {transform_indices = @transform_1, window_bounds = array<i64: 4, 128>}, {transform_indices = @transform_2, window_bounds = array<i64: 4, 128>}, {transform_indices = @transform_3, window_bounds = array<i64: 1, 1, 1>}]} {
    %c0_i32 = arith.constant 0 : i32
    %0 = arith.cmpi eq, %arg1, %c0_i32 : i32
    %1 = arith.extui %0 : i1 to i32
    %c0_i32_0 = arith.constant 0 : i32
    %2 = arith.cmpi ne, %1, %c0_i32_0 : i32
    scf.if %2 {
      %cst_17 = arith.constant 0.000000e+00 : f32
      %48 = vector.broadcast %cst_17 : f32 to vector<1x1x1xf32>
      %c0_18 = arith.constant 0 : index
      %c0_19 = arith.constant 0 : index
      %c0_20 = arith.constant 0 : index
      %49 = vector.load %arg5[%c0_18, %c0_19, %c0_20] : memref<1x1x1xf32, #tpu.memory_space<vmem>>, vector<1x1x1xf32>
      tpu.vector_store %arg5[%c0_18, %c0_19, %c0_20], %48 {strides = array<i32>} : memref<1x1x1xf32, #tpu.memory_space<vmem>>, vector<1x1x1xf32>,
    } else {
    }
    %c0 = arith.constant 0 : index
    %c0_1 = arith.constant 0 : index
    %3 = vector.load %arg3[%c0, %c0_1] : memref<4x128xf32, #tpu.memory_space<vmem>>, vector<4x128xf32>
    %c0_2 = arith.constant 0 : index
    %c0_3 = arith.constant 0 : index
    %4 = vector.load %arg4[%c0_2, %c0_3] : memref<4x128xf32, #tpu.memory_space<vmem>>, vector<4x128xf32>
    %c0_4 = arith.constant 0 : index
    %c0_5 = arith.constant 0 : index
    %5 = vector.load %arg2[%c0_4, %c0_5] : memref<128x4xbf16, #tpu.memory_space<vmem>>, vector<128x4xbf16>
    %6 = arith.mulf %3, %4 : vector<4x128xf32>
    %7 = arith.truncf %6 : vector<4x128xf32> to vector<4x128xbf16>
    %8 = arith.extf %7 : vector<4x128xbf16> to vector<4x128xf32>
    %9 = arith.subf %6, %8 : vector<4x128xf32>
    %10 = arith.truncf %9 : vector<4x128xf32> to vector<4x128xbf16>
    %cst = arith.constant dense<0.000000e+00> : vector<4x4xf32>
    %11 = tpu.matmul %7, %5, %cst {dimension_numbers = #tpu.dot_dimension_numbers<[1], [0], [0], [1], [0, 0, 1, 1], [], []>} : vector<4x128xbf16>, vector<128x4xbf16>, vector<4x4xf32> -> vector<4x4xf32>
    %cst_6 = arith.constant dense<0.000000e+00> : vector<4x4xf32>
    %12 = tpu.matmul %10, %5, %cst_6 {dimension_numbers = #tpu.dot_dimension_numbers<[1], [0], [0], [1], [0, 0, 1, 1], [], []>} : vector<4x128xbf16>, vector<128x4xbf16>, vector<4x4xf32> -> vector<4x4xf32>
    %13 = arith.addf %11, %12 : vector<4x4xf32>
    %14 = arith.mulf %3, %3 : vector<4x128xf32>
    %15 = arith.truncf %14 : vector<4x128xf32> to vector<4x128xbf16>
    %16 = arith.extf %15 : vector<4x128xbf16> to vector<4x128xf32>
    %17 = arith.subf %14, %16 : vector<4x128xf32>
    %18 = arith.truncf %17 : vector<4x128xf32> to vector<4x128xbf16>
    %cst_7 = arith.constant dense<0.000000e+00> : vector<4x4xf32>
    %19 = tpu.matmul %15, %5, %cst_7 {dimension_numbers = #tpu.dot_dimension_numbers<[1], [0], [0], [1], [0, 0, 1, 1], [], []>} : vector<4x128xbf16>, vector<128x4xbf16>, vector<4x4xf32> -> vector<4x4xf32>
    %cst_8 = arith.constant dense<0.000000e+00> : vector<4x4xf32>
    %20 = tpu.matmul %18, %5, %cst_8 {dimension_numbers = #tpu.dot_dimension_numbers<[1], [0], [0], [1], [0, 0, 1, 1], [], []>} : vector<4x128xbf16>, vector<128x4xbf16>, vector<4x4xf32> -> vector<4x4xf32>
    %21 = arith.addf %19, %20 : vector<4x4xf32>
    %22 = arith.mulf %4, %4 : vector<4x128xf32>
    %23 = arith.truncf %22 : vector<4x128xf32> to vector<4x128xbf16>
    %24 = arith.extf %23 : vector<4x128xbf16> to vector<4x128xf32>
    %25 = arith.subf %22, %24 : vector<4x128xf32>
    %26 = arith.truncf %25 : vector<4x128xf32> to vector<4x128xbf16>
    %cst_9 = arith.constant dense<0.000000e+00> : vector<4x4xf32>
    %27 = tpu.matmul %23, %5, %cst_9 {dimension_numbers = #tpu.dot_dimension_numbers<[1], [0], [0], [1], [0, 0, 1, 1], [], []>} : vector<4x128xbf16>, vector<128x4xbf16>, vector<4x4xf32> -> vector<4x4xf32>
    %cst_10 = arith.constant dense<0.000000e+00> : vector<4x4xf32>
    %28 = tpu.matmul %26, %5, %cst_10 {dimension_numbers = #tpu.dot_dimension_numbers<[1], [0], [0], [1], [0, 0, 1, 1], [], []>} : vector<4x128xbf16>, vector<128x4xbf16>, vector<4x4xf32> -> vector<4x4xf32>
    %29 = arith.addf %27, %28 : vector<4x4xf32>
    %cst_11 = arith.constant 1.000000e-24 : f32
    %30 = vector.broadcast %cst_11 : f32 to vector<4x4xf32>
    %31 = arith.maximumf %21, %30 : vector<4x4xf32>
    %32 = math.rsqrt %31 : vector<4x4xf32>
    %33 = arith.mulf %13, %32 : vector<4x4xf32>
    %cst_12 = arith.constant 1.000000e-24 : f32
    %34 = vector.broadcast %cst_12 : f32 to vector<4x4xf32>
    %35 = arith.maximumf %29, %34 : vector<4x4xf32>
    %36 = math.rsqrt %35 : vector<4x4xf32>
    %37 = arith.mulf %33, %36 : vector<4x4xf32>
    %c1_i32 = arith.constant 1 : i32
    %38 = arith.muli %arg0, %c1_i32 : i32
    %39 = arith.addi %38, %arg1 : i32
    %c4_i32 = arith.constant 4 : i32
    %40 = arith.muli %39, %c4_i32 : i32
    %c4_i32_13 = arith.constant 4 : i32
    %41 = arith.addi %40, %c4_i32_13 : i32
    %c4_i32_14 = arith.constant 4 : i32
    %42 = arith.cmpi sgt, %41, %c4_i32_14 : i32
    %true = arith.constant true
    %43 = arith.xori %42, %true : i1
    %44 = arith.extui %43 : i1 to i32
    %c0_i32_15 = arith.constant 0 : i32
    %45 = arith.cmpi ne, %44, %c0_i32_15 : i32
    scf.if %45 {
      %c0_17 = arith.constant 0 : index
      %c0_18 = arith.constant 0 : index
      %c0_19 = arith.constant 0 : index
      %48 = vector.load %arg5[%c0_17, %c0_18, %c0_19] : memref<1x1x1xf32, #tpu.memory_space<vmem>>, vector<1x1x1xf32>
      %49 = vector.shape_cast %37 : vector<4x4xf32> to vector<1x4x4xf32>
      %cst_20 = arith.constant dense<0.000000e+00> : vector<1xf32>
      %50 = vector.multi_reduction <add>, %49, %cst_20 [1, 2] : vector<1x4x4xf32> to vector<1xf32>
      %51 = vector.shape_cast %50 : vector<1xf32> to vector<1x1x1xf32>
      %52 = vector.extract %51[0, 0, 0] : f32 from vector<1x1x1xf32>
      %53 = vector.broadcast %52 : f32 to vector<1x1x1xf32>
      %54 = arith.addf %48, %53 : vector<1x1x1xf32>
      %c0_21 = arith.constant 0 : index
      %c0_22 = arith.constant 0 : index
      %c0_23 = arith.constant 0 : index
      %55 = vector.load %arg5[%c0_21, %c0_22, %c0_23] : memref<1x1x1xf32, #tpu.memory_space<vmem>>, vector<1x1x1xf32>
      tpu.vector_store %arg5[%c0_21, %c0_22, %c0_23], %54 {strides = array<i32>} : memref<1x1x1xf32, #tpu.memory_space<vmem>>, vector<1x1x1xf32>,
    } else {
    }
    %46 = arith.extui %42 : i1 to i32
    %c0_i32_16 = arith.constant 0 : i32
    %47 = arith.cmpi ne, %46, %c0_i32_16 : i32
    scf.if %47 {
      %48 = tpu.iota {dimensions = array<i32: 0>} : vector<4x4xi32>
      %49 = vector.broadcast %40 : i32 to vector<4x4xi32>
      %50 = arith.addi %49, %48 : vector<4x4xi32>
      %c4_i32_17 = arith.constant 4 : i32
      %51 = vector.broadcast %c4_i32_17 : i32 to vector<4x4xi32>
      %52 = arith.cmpi slt, %50, %51 : vector<4x4xi32>
      %c0_18 = arith.constant 0 : index
      %c0_19 = arith.constant 0 : index
      %c0_20 = arith.constant 0 : index
      %53 = vector.load %arg5[%c0_18, %c0_19, %c0_20] : memref<1x1x1xf32, #tpu.memory_space<vmem>>, vector<1x1x1xf32>
      %cst_21 = arith.constant 0.000000e+00 : f32
      %54 = vector.broadcast %cst_21 : f32 to vector<4x4xf32>
      %55 = arith.select %52, %37, %54 : vector<4x4xi1>, vector<4x4xf32>
      %56 = vector.shape_cast %55 : vector<4x4xf32> to vector<1x4x4xf32>
      %cst_22 = arith.constant dense<0.000000e+00> : vector<1xf32>
      %57 = vector.multi_reduction <add>, %56, %cst_22 [1, 2] : vector<1x4x4xf32> to vector<1xf32>
      %58 = vector.shape_cast %57 : vector<1xf32> to vector<1x1x1xf32>
      %59 = vector.extract %58[0, 0, 0] : f32 from vector<1x1x1xf32>
      %60 = vector.broadcast %59 : f32 to vector<1x1x1xf32>
      %61 = arith.addf %53, %60 : vector<1x1x1xf32>
      %c0_23 = arith.constant 0 : index
      %c0_24 = arith.constant 0 : index
      %c0_25 = arith.constant 0 : index
      %62 = vector.load %arg5[%c0_23, %c0_24, %c0_25] : memref<1x1x1xf32, #tpu.memory_space<vmem>>, vector<1x1x1xf32>
      tpu.vector_store %arg5[%c0_23, %c0_24, %c0_25], %61 {strides = array<i32>} : memref<1x1x1xf32, #tpu.memory_space<vmem>>, vector<1x1x1xf32>,
    } else {
    }
    return
  }
  func.func @transform_0(%arg0: i32, %arg1: i32) -> (i32, i32) {
    %c0_i32 = arith.constant 0 : i32
    %c0_i32_0 = arith.constant 0 : i32
    %c0_i32_1 = arith.constant 0 : i32
    return %c0_i32, %c0_i32_0 : i32, i32
  }
  func.func @transform_1(%arg0: i32, %arg1: i32) -> (i32, i32) {
    %c1_i32 = arith.constant 1 : i32
    %0 = arith.muli %arg0, %c1_i32 : i32
    %1 = arith.addi %0, %arg1 : i32
    %c0_i32 = arith.constant 0 : i32
    %2 = arith.minsi %1, %c0_i32 : i32
    %c0_i32_0 = arith.constant 0 : i32
    %c0_i32_1 = arith.constant 0 : i32
    return %2, %c0_i32_0 : i32, i32
  }
  func.func @transform_2(%arg0: i32, %arg1: i32) -> (i32, i32) {
    %c1_i32 = arith.constant 1 : i32
    %0 = arith.muli %arg0, %c1_i32 : i32
    %1 = arith.addi %0, %arg1 : i32
    %c0_i32 = arith.constant 0 : i32
    %2 = arith.minsi %1, %c0_i32 : i32
    %c0_i32_0 = arith.constant 0 : i32
    %c0_i32_1 = arith.constant 0 : i32
    return %2, %c0_i32_0 : i32, i32
  }
  func.func @transform_3(%arg0: i32, %arg1: i32) -> (i32, i32, i32) {
    %c0_i32 = arith.constant 0 : i32
    %c0_i32_0 = arith.constant 0 : i32
    %c0_i32_1 = arith.constant 0 : i32
    return %arg0, %c0_i32, %c0_i32_0 : i32, i32, i32
  }
}

</mosaic_0001>

<llo_original>
// kernel: tpu_custom_call.1
$region0: #{tpu_custom_call.1}
  #allocation0 [shape = 'u32[]', space=smem, size = 0x4, offset = 0x4, fixed_abs, tag = 'smem constant byte address 0x4 - core index']
  #allocation1 [shape = 'u32[144,128]{1,0:T(1,128)}', space=vmem, size = 0x12000, scoped, tag = 'internal scratch']
  %s0 = inlined_call_operand.vmem [shape: bf16[128,4], index: 0, kind: input, shape index: {}]
  %s1 = inlined_call_operand.vmem [shape: f32[4,128], index: 1, kind: input, shape index: {}]
  %s2 = inlined_call_operand.vmem [shape: f32[4,128], index: 2, kind: input, shape index: {}]
  %s3 = inlined_call_operand.hbm [shape: f32[1,1,1], index: 3, kind: output, shape index: {}]
  %s4 = sld [smem:[#allocation0]]
  $region34: #{tpu_custom_call.1} parent=0
    _
  %s6 = ssub.s32 1, %s4
  %s7 = scalar_select 0, %s6, %s4
  $region1: #{tpu_custom_call.1} parent=0
    #allocation2 [shape = 'u8[512]{0}', space=vmem, size = 0x400, scoped, tag = 'output window, operand 0, single buffered']
    #allocation3 [shape = 's32[1]{0}', space=sflag, size = 0x4, scoped, tag = 'scoped memory for tpu_custom_call.1']
    %8 = vsyncpa [#allocation3], 0
    // Predicated region
    $region2: #{tpu_custom_call.1} parent=1 // pred_check
      _
    $region3: #{tpu_custom_call.1} parent=1 // pred_check_branch
      %10 = sbr.rel (0) target = $region5
    $region4: #{tpu_custom_call.1} parent=1 // pred_region
      _
    $region5: #{tpu_custom_call.1} parent=1 // pred_fallthru
      _
    // Predicated region
    $region6: #{tpu_custom_call.1} parent=1 // pred_check
      _
    $region7: #{tpu_custom_call.1} parent=1 // pred_check_branch
      %12 = sbr.rel (0) target = $region9
    $region8: #{tpu_custom_call.1} parent=1 // pred_region
      %s13 = sadd.s32 0, 0
      %p14 = scmp.lt.s32.totalorder %s13, 0
      %s15 = scalar_select %p14, %s13, 0
      %p16 = scmp.lt.s32.totalorder %s15, 0
      %s17 = scalar_select %p16, %s15, 0
      %s18 = smul.addr %s17, 4
      %s19 = scalar_lea.vmem %s1, %s18
      %s20 = sadd.s32 0, 0
      %p21 = scmp.lt.s32.totalorder %s20, 0
      %s22 = scalar_select %p21, %s20, 0
    $region9: #{tpu_custom_call.1} parent=1 // pred_fallthru
      _
    // Predicated region
    $region10: #{tpu_custom_call.1} parent=1 // pred_check
      _
    $region11: #{tpu_custom_call.1} parent=1 // pred_check_branch
      %24 = sbr.rel (0) target = $region13
    $region12: #{tpu_custom_call.1} parent=1 // pred_region
      %s25 = sadd.s32 0, 0
      %p26 = scmp.lt.s32.totalorder %s25, 0
      %s27 = scalar_select %p26, %s25, 0
      %p28 = scmp.lt.s32.totalorder %s27, 0
      %s29 = scalar_select %p28, %s27, 0
      %s30 = smul.addr %s29, 4
      %s31 = scalar_lea.vmem %s2, %s30
      %s32 = sadd.s32 0, 0
      %p33 = scmp.lt.s32.totalorder %s32, 0
      %s34 = scalar_select %p33, %s32, 0
    $region13: #{tpu_custom_call.1} parent=1 // pred_fallthru
      _
    %s35 = sadd.s32 0, 0
    %p36 = scmp.lt.s32.totalorder %s35, 0
    %s37 = scalar_select %p36, %s35, 0
    %p38 = scmp.lt.s32.totalorder %s37, 0
    %s39 = scalar_select %p38, %s37, 0
    %s40 = smul.addr %s39, 4
    %s41 = scalar_lea.vmem %s1, %s40
    %s42 = sadd.s32 0, 0
    %p43 = scmp.lt.s32.totalorder %s42, 0
    %s44 = scalar_select %p43, %s42, 0
    %p45 = scmp.lt.s32.totalorder %s44, 0
    %s46 = scalar_select %p45, %s44, 0
    %s47 = smul.addr %s46, 4
    %s48 = scalar_lea.vmem %s2, %s47
    %s49 = sadd.s32 0, 0
    %p50 = scmp.lt.s32.totalorder %s49, 0
    %s51 = scalar_select %p50, %s49, 0
    %p52 = scmp.lt.s32.totalorder %s51, 0
    %s53 = scalar_select %p52, %s51, 0
    %s54 = smul.addr %s53, 4
    %s55 = scalar_lea.vmem %s1, %s54
    %s56 = sadd.s32 0, 0
    %p57 = scmp.lt.s32.totalorder %s56, 0
    %s58 = scalar_select %p57, %s56, 0
    %s59 = sadd.s32 0, 0
    %p60 = scmp.lt.s32.totalorder %s59, 0
    %s61 = scalar_select %p60, %s59, 0
    %p62 = scmp.lt.s32.totalorder %s61, 0
    %s63 = scalar_select %p62, %s61, 0
    %s64 = smul.addr %s63, 4
    %s65 = scalar_lea.vmem %s2, %s64
    %s66 = sadd.s32 0, 0
    %p67 = scmp.lt.s32.totalorder %s66, 0
    %s68 = scalar_select %p67, %s66, 0
    %p70 = scmp.eq.s32.totalorder 0, 0
    // Predicated region
    $region14: #{tpu_custom_call.1} parent=1 // pred_check
      %p71 = pneg %p70
    $region15: #{tpu_custom_call.1} parent=1 // pred_check_branch
      %73 = sbr.rel (%p71) target = $region17
    $region16: #{tpu_custom_call.1} parent=1 // pred_region
      %vm74 = vcmask 0
      %75 = vst.msk [vmem:[#allocation2] sm:$0x1] %vm74, 0.0
    $region17: #{tpu_custom_call.1} parent=1 // pred_fallthru
      _
    %v76 = vld [vmem:[%s55] sm:$0xf]
    %v77 = vld [vmem:[%s65] sm:$0xf]
    %v78 = vld [vmem:[%s0] sm:$0xf]
    %v79 = vld [vmem:[%s0 + $0x4] sm:$0xf]
    %v80 = vld [vmem:[%s0 + $0x8] sm:$0xf]
    %v81 = vld [vmem:[%s0 + $0xc] sm:$0xf]
    %v82 = vld [vmem:[%s0 + $0x10] sm:$0xf]
    %v83 = vld [vmem:[%s0 + $0x14] sm:$0xf]
    %v84 = vld [vmem:[%s0 + $0x18] sm:$0xf]
    %v85 = vld [vmem:[%s0 + $0x1c] sm:$0xf]
    %v86 = vld [vmem:[%s0 + $0x20] sm:$0xf]
    %v87 = vld [vmem:[%s0 + $0x24] sm:$0xf]
    %v88 = vld [vmem:[%s0 + $0x28] sm:$0xf]
    %v89 = vld [vmem:[%s0 + $0x2c] sm:$0xf]
    %v90 = vld [vmem:[%s0 + $0x30] sm:$0xf]
    %v91 = vld [vmem:[%s0 + $0x34] sm:$0xf]
    %v92 = vld [vmem:[%s0 + $0x38] sm:$0xf]
    %v93 = vld [vmem:[%s0 + $0x3c] sm:$0xf]
    %v94 = vmul.f32 %v76, %v77
    %v95 = vpack.c.bf16 %v94, %v94
    %v96 = vunpack.c.l.bf16 %v95
    %v97 = vsub.f32 %v94, %v96
    %v98 = vpack.c.bf16 %v97, %v97
    %v115 = vunpack.c.l.b16 %v78
    %v116 = vunpack.c.l.b16 %v79
    %v117 = vunpack.c.l.b16 %v80
    %v118 = vunpack.c.l.b16 %v81
    %v119 = vunpack.c.l.b16 %v82
    %v120 = vunpack.c.l.b16 %v83
    %v121 = vunpack.c.l.b16 %v84
    %v122 = vunpack.c.l.b16 %v85
    %v123 = vunpack.c.l.b16 %v86
    %v124 = vunpack.c.l.b16 %v87
    %v125 = vunpack.c.l.b16 %v88
    %v126 = vunpack.c.l.b16 %v89
    %v127 = vunpack.c.l.b16 %v90
    %v128 = vunpack.c.l.b16 %v91
    %v129 = vunpack.c.l.b16 %v92
    %v130 = vunpack.c.l.b16 %v93
    %v131 = vpack.c.b16 %v116, %v115
    %v132 = vpack.c.b16 %v118, %v117
    %v133 = vpack.c.b16 %v120, %v119
    %v134 = vpack.c.b16 %v122, %v121
    %v135 = vpack.c.b16 %v124, %v123
    %v136 = vpack.c.b16 %v126, %v125
    %v137 = vpack.c.b16 %v128, %v127
    %v138 = vpack.c.b16 %v130, %v129
    %147 = vmatprep.subr.bf16.mxu0 0
    %148 = vmatpush1.bf16.msra.mxu0 %v138
    %149 = vmatprep.subr.bf16.mxu0 0
    %150 = vmatpush1.bf16.msra.mxu0 %v137
    %151 = vmatprep.subr.bf16.mxu0 0
    %152 = vmatpush1.bf16.msra.mxu0 %v136
    %153 = vmatprep.subr.bf16.mxu0 0
    %154 = vmatpush1.bf16.msra.mxu0 %v135
    %155 = vmatprep.subr.bf16.mxu0 0
    %156 = vmatpush1.bf16.msra.mxu0 %v134
    %157 = vmatprep.subr.bf16.mxu0 0
    %158 = vmatpush1.bf16.msra.mxu0 %v133
    %159 = vmatprep.subr.bf16.mxu0 0
    %160 = vmatpush1.bf16.msra.mxu0 %v132
    %161 = vmatprep.subr.bf16.mxu0 0
    %162 = vmatpush1.bf16.msra.mxu0 %v131
    %163 = vmatprep.subr.bf16.mxu0 0
    %164 = vmatpush2.bf16.msra.mxu0 0
    %165 = vmatprep.subr.bf16.mxu0 0
    %166 = vmatpush2.bf16.msra.mxu0 0
    %167 = vmatprep.subr.bf16.mxu0 0
    %168 = vmatpush2.bf16.msra.mxu0 0
    %169 = vmatprep.subr.bf16.mxu0 0
    %170 = vmatpush2.bf16.msra.mxu0 0
    %171 = vmatprep.subr.bf16.mxu0 0
    %172 = vmatpush2.bf16.msra.mxu0 0
    %173 = vmatprep.subr.bf16.mxu0 0
    %174 = vmatpush2.bf16.msra.mxu0 0
    %175 = vmatprep.subr.bf16.mxu0 0
    %176 = vmatpush2.bf16.msra.mxu0 0
    %177 = vmatprep.subr.bf16.mxu0 0
    %178 = vmatpush2.bf16.msra.mxu0 0
    %179 = vmatprep.mubr.bf16.mxu0 0
    %180 = vmatmul.mubr.bf16.gmra.mxu0 %v98
    %v181 = vpop.f32.mrf.mxu0
    %v182 = vadd.f32 0.0, %v181
    %v183 = vpop.f32.mrf.mxu0
    %v184 = vpop.f32.mrf.mxu0
    %v185 = vpop.f32.mrf.mxu0
    %186 = vdwg.mxu0
    %187 = vmatprep.subr.bf16.mxu0 0
    %188 = vmatpush1.bf16.msra.mxu0 %v138
    %189 = vmatprep.subr.bf16.mxu0 0
    %190 = vmatpush1.bf16.msra.mxu0 %v137
    %191 = vmatprep.subr.bf16.mxu0 0
    %192 = vmatpush1.bf16.msra.mxu0 %v136
    %193 = vmatprep.subr.bf16.mxu0 0
    %194 = vmatpush1.bf16.msra.mxu0 %v135
    %195 = vmatprep.subr.bf16.mxu0 0
    %196 = vmatpush1.bf16.msra.mxu0 %v134
    %197 = vmatprep.subr.bf16.mxu0 0
    %198 = vmatpush1.bf16.msra.mxu0 %v133
    %199 = vmatprep.subr.bf16.mxu0 0
    %200 = vmatpush1.bf16.msra.mxu0 %v132
    %201 = vmatprep.subr.bf16.mxu0 0
    %202 = vmatpush1.bf16.msra.mxu0 %v131
    %203 = vmatprep.subr.bf16.mxu0 0
    %204 = vmatpush2.bf16.msra.mxu0 0
    %205 = vmatprep.subr.bf16.mxu0 0
    %206 = vmatpush2.bf16.msra.mxu0 0
    %207 = vmatprep.subr.bf16.mxu0 0
    %208 = vmatpush2.bf16.msra.mxu0 0
    %209 = vmatprep.subr.bf16.mxu0 0
    %210 = vmatpush2.bf16.msra.mxu0 0
    %211 = vmatprep.subr.bf16.mxu0 0
    %212 = vmatpush2.bf16.msra.mxu0 0
    %213 = vmatprep.subr.bf16.mxu0 0
    %214 = vmatpush2.bf16.msra.mxu0 0
    %215 = vmatprep.subr.bf16.mxu0 0
    %216 = vmatpush2.bf16.msra.mxu0 0
    %217 = vmatprep.subr.bf16.mxu0 0
    %218 = vmatpush2.bf16.msra.mxu0 0
    %219 = vmatprep.mubr.bf16.mxu0 0
    %220 = vmatmul.mubr.bf16.gmra.mxu0 %v95
    %v221 = vpop.f32.mrf.mxu0
    %v222 = vadd.f32 %v182, %v221
    %v223 = vpop.f32.mrf.mxu0
    %v224 = vpop.f32.mrf.mxu0
    %v225 = vpop.f32.mrf.mxu0
    %226 = vdwg.mxu0
    %v227 = vmul.f32 %v76, %v76
    %v228 = vpack.c.bf16 %v227, %v227
    %v229 = vunpack.c.l.bf16 %v228
    %v230 = vsub.f32 %v227, %v229
    %v231 = vpack.c.bf16 %v230, %v230
    %232 = vmatprep.subr.bf16.mxu0 0
    %233 = vmatpush1.bf16.msra.mxu0 %v138
    %234 = vmatprep.subr.bf16.mxu0 0
    %235 = vmatpush1.bf16.msra.mxu0 %v137
    %236 = vmatprep.subr.bf16.mxu0 0
    %237 = vmatpush1.bf16.msra.mxu0 %v136
    %238 = vmatprep.subr.bf16.mxu0 0
    %239 = vmatpush1.bf16.msra.mxu0 %v135
    %240 = vmatprep.subr.bf16.mxu0 0
    %241 = vmatpush1.bf16.msra.mxu0 %v134
    %242 = vmatprep.subr.bf16.mxu0 0
    %243 = vmatpush1.bf16.msra.mxu0 %v133
    %244 = vmatprep.subr.bf16.mxu0 0
    %245 = vmatpush1.bf16.msra.mxu0 %v132
    %246 = vmatprep.subr.bf16.mxu0 0
    %247 = vmatpush1.bf16.msra.mxu0 %v131
    %248 = vmatprep.subr.bf16.mxu0 0
    %249 = vmatpush2.bf16.msra.mxu0 0
    %250 = vmatprep.subr.bf16.mxu0 0
    %251 = vmatpush2.bf16.msra.mxu0 0
    %252 = vmatprep.subr.bf16.mxu0 0
    %253 = vmatpush2.bf16.msra.mxu0 0
    %254 = vmatprep.subr.bf16.mxu0 0
    %255 = vmatpush2.bf16.msra.mxu0 0
    %256 = vmatprep.subr.bf16.mxu0 0
    %257 = vmatpush2.bf16.msra.mxu0 0
    %258 = vmatprep.subr.bf16.mxu0 0
    %259 = vmatpush2.bf16.msra.mxu0 0
    %260 = vmatprep.subr.bf16.mxu0 0
    %261 = vmatpush2.bf16.msra.mxu0 0
    %262 = vmatprep.subr.bf16.mxu0 0
    %263 = vmatpush2.bf16.msra.mxu0 0
    %264 = vmatprep.mubr.bf16.mxu0 0
    %265 = vmatmul.mubr.bf16.gmra.mxu0 %v231
    %v266 = vpop.f32.mrf.mxu0
    %v267 = vadd.f32 0.0, %v266
    %v268 = vpop.f32.mrf.mxu0
    %v269 = vpop.f32.mrf.mxu0
    %v270 = vpop.f32.mrf.mxu0
    %271 = vdwg.mxu0
    %272 = vmatprep.subr.bf16.mxu0 0
    %273 = vmatpush1.bf16.msra.mxu0 %v138
    %274 = vmatprep.subr.bf16.mxu0 0
    %275 = vmatpush1.bf16.msra.mxu0 %v137
    %276 = vmatprep.subr.bf16.mxu0 0
    %277 = vmatpush1.bf16.msra.mxu0 %v136
    %278 = vmatprep.subr.bf16.mxu0 0
    %279 = vmatpush1.bf16.msra.mxu0 %v135
    %280 = vmatprep.subr.bf16.mxu0 0
    %281 = vmatpush1.bf16.msra.mxu0 %v134
    %282 = vmatprep.subr.bf16.mxu0 0
    %283 = vmatpush1.bf16.msra.mxu0 %v133
    %284 = vmatprep.subr.bf16.mxu0 0
    %285 = vmatpush1.bf16.msra.mxu0 %v132
    %286 = vmatprep.subr.bf16.mxu0 0
    %287 = vmatpush1.bf16.msra.mxu0 %v131
    %288 = vmatprep.subr.bf16.mxu0 0
    %289 = vmatpush2.bf16.msra.mxu0 0
    %290 = vmatprep.subr.bf16.mxu0 0
    %291 = vmatpush2.bf16.msra.mxu0 0
    %292 = vmatprep.subr.bf16.mxu0 0
    %293 = vmatpush2.bf16.msra.mxu0 0
    %294 = vmatprep.subr.bf16.mxu0 0
    %295 = vmatpush2.bf16.msra.mxu0 0
    %296 = vmatprep.subr.bf16.mxu0 0
    %297 = vmatpush2.bf16.msra.mxu0 0
    %298 = vmatprep.subr.bf16.mxu0 0
    %299 = vmatpush2.bf16.msra.mxu0 0
    %300 = vmatprep.subr.bf16.mxu0 0
    %301 = vmatpush2.bf16.msra.mxu0 0
    %302 = vmatprep.subr.bf16.mxu0 0
    %303 = vmatpush2.bf16.msra.mxu0 0
    %304 = vmatprep.mubr.bf16.mxu0 0
    %305 = vmatmul.mubr.bf16.gmra.mxu0 %v228
    %v306 = vpop.f32.mrf.mxu0
    %v307 = vadd.f32 %v267, %v306
    %v308 = vpop.f32.mrf.mxu0
    %v309 = vpop.f32.mrf.mxu0
    %v310 = vpop.f32.mrf.mxu0
    %311 = vdwg.mxu0
    %v312 = vmul.f32 %v77, %v77
    %v313 = vpack.c.bf16 %v312, %v312
    %v314 = vunpack.c.l.bf16 %v313
    %v315 = vsub.f32 %v312, %v314
    %v316 = vpack.c.bf16 %v315, %v315
    %317 = vmatprep.subr.bf16.mxu0 0
    %318 = vmatpush1.bf16.msra.mxu0 %v138
    %319 = vmatprep.subr.bf16.mxu0 0
    %320 = vmatpush1.bf16.msra.mxu0 %v137
    %321 = vmatprep.subr.bf16.mxu0 0
    %322 = vmatpush1.bf16.msra.mxu0 %v136
    %323 = vmatprep.subr.bf16.mxu0 0
    %324 = vmatpush1.bf16.msra.mxu0 %v135
    %325 = vmatprep.subr.bf16.mxu0 0
    %326 = vmatpush1.bf16.msra.mxu0 %v134
    %327 = vmatprep.subr.bf16.mxu0 0
    %328 = vmatpush1.bf16.msra.mxu0 %v133
    %329 = vmatprep.subr.bf16.mxu0 0
    %330 = vmatpush1.bf16.msra.mxu0 %v132
    %331 = vmatprep.subr.bf16.mxu0 0
    %332 = vmatpush1.bf16.msra.mxu0 %v131
    %333 = vmatprep.subr.bf16.mxu0 0
    %334 = vmatpush2.bf16.msra.mxu0 0
    %335 = vmatprep.subr.bf16.mxu0 0
    %336 = vmatpush2.bf16.msra.mxu0 0
    %337 = vmatprep.subr.bf16.mxu0 0
    %338 = vmatpush2.bf16.msra.mxu0 0
    %339 = vmatprep.subr.bf16.mxu0 0
    %340 = vmatpush2.bf16.msra.mxu0 0
    %341 = vmatprep.subr.bf16.mxu0 0
    %342 = vmatpush2.bf16.msra.mxu0 0
    %343 = vmatprep.subr.bf16.mxu0 0
    %344 = vmatpush2.bf16.msra.mxu0 0
    %345 = vmatprep.subr.bf16.mxu0 0
    %346 = vmatpush2.bf16.msra.mxu0 0
    %347 = vmatprep.subr.bf16.mxu0 0
    %348 = vmatpush2.bf16.msra.mxu0 0
    %349 = vmatprep.mubr.bf16.mxu0 0
    %350 = vmatmul.mubr.bf16.gmra.mxu0 %v316
    %v351 = vpop.f32.mrf.mxu0
    %v352 = vadd.f32 0.0, %v351
    %v353 = vpop.f32.mrf.mxu0
    %v354 = vpop.f32.mrf.mxu0
    %v355 = vpop.f32.mrf.mxu0
    %356 = vdwg.mxu0
    %357 = vmatprep.subr.bf16.mxu0 0
    %358 = vmatpush1.bf16.msra.mxu0 %v138
    %359 = vmatprep.subr.bf16.mxu0 0
    %360 = vmatpush1.bf16.msra.mxu0 %v137
    %361 = vmatprep.subr.bf16.mxu0 0
    %362 = vmatpush1.bf16.msra.mxu0 %v136
    %363 = vmatprep.subr.bf16.mxu0 0
    %364 = vmatpush1.bf16.msra.mxu0 %v135
    %365 = vmatprep.subr.bf16.mxu0 0
    %366 = vmatpush1.bf16.msra.mxu0 %v134
    %367 = vmatprep.subr.bf16.mxu0 0
    %368 = vmatpush1.bf16.msra.mxu0 %v133
    %369 = vmatprep.subr.bf16.mxu0 0
    %370 = vmatpush1.bf16.msra.mxu0 %v132
    %371 = vmatprep.subr.bf16.mxu0 0
    %372 = vmatpush1.bf16.msra.mxu0 %v131
    %373 = vmatprep.subr.bf16.mxu0 0
    %374 = vmatpush2.bf16.msra.mxu0 0
    %375 = vmatprep.subr.bf16.mxu0 0
    %376 = vmatpush2.bf16.msra.mxu0 0
    %377 = vmatprep.subr.bf16.mxu0 0
    %378 = vmatpush2.bf16.msra.mxu0 0
    %379 = vmatprep.subr.bf16.mxu0 0
    %380 = vmatpush2.bf16.msra.mxu0 0
    %381 = vmatprep.subr.bf16.mxu0 0
    %382 = vmatpush2.bf16.msra.mxu0 0
    %383 = vmatprep.subr.bf16.mxu0 0
    %384 = vmatpush2.bf16.msra.mxu0 0
    %385 = vmatprep.subr.bf16.mxu0 0
    %386 = vmatpush2.bf16.msra.mxu0 0
    %387 = vmatprep.subr.bf16.mxu0 0
    %388 = vmatpush2.bf16.msra.mxu0 0
    %389 = vmatprep.mubr.bf16.mxu0 0
    %390 = vmatmul.mubr.bf16.gmra.mxu0 %v313
    %v391 = vpop.f32.mrf.mxu0
    %v392 = vadd.f32 %v352, %v391
    %v393 = vpop.f32.mrf.mxu0
    %v394 = vpop.f32.mrf.mxu0
    %v395 = vpop.f32.mrf.mxu0
    %396 = vdwg.mxu0
    %v397 = vmax.f32 %v307, 1e-24
    %v398 = vrsqrt.pop %v397
    %v399 = vmul.f32 %v222, %v398
    %v400 = vmax.f32 %v392, 1e-24
    %v401 = vrsqrt.pop %v400
    %v402 = vmul.f32 %v399, %v401
    %s403 = sadd.s32 0, 0
    %s404 = smul.u32 %s403, 4
    %s405 = sadd.s32 %s404, 4
    %p406 = scmp.gt.s32.totalorder %s405, 4
    %p407 = scmp.le.s32.totalorder %s405, 4
    // Predicated region
    $region18: #{tpu_custom_call.1} parent=1 // pred_check
      %p408 = pneg %p407
    $region19: #{tpu_custom_call.1} parent=1 // pred_check_branch
      %410 = sbr.rel (%p408) target = $region21
    $region20: #{tpu_custom_call.1} parent=1 // pred_region
      %v411 = vld [vmem:[#allocation2] sm:$0x1]
      %vm412 = vcmask 27648
      %v413 = vsel %vm412, %v402, 0.0
      %414 = vadd.xlane.f32.xlu0 %v413
      %v415 = vpop.xlane.xlu0 %414
      %v416 = vrot.slane %v415, 4
      %v417 = vadd.f32 %v415, %v416
      %v418 = vrot.slane %v417, 2
      %v419 = vadd.f32 %v417, %v418
      %v420 = vrot.slane %v419, 1
      %v421 = vadd.f32 %v419, %v420
      %s422 = vtos %v421
      %v423 = vstv %s422
      %v424 = vadd.f32 %v411, %v423
      %vm425 = vcmask 0
      %426 = vst.msk [vmem:[#allocation2] sm:$0x1] %vm425, %v424
    $region21: #{tpu_custom_call.1} parent=1 // pred_fallthru
      _
    // Predicated region
    $region22: #{tpu_custom_call.1} parent=1 // pred_check
      %p427 = pneg %p406
    $region23: #{tpu_custom_call.1} parent=1 // pred_check_branch
      %429 = sbr.rel (%p427) target = $region25
    $region24: #{tpu_custom_call.1} parent=1 // pred_region
      %v430 = vlaneseq
      %v431 = vshrl.u32 %v430, 7
      %v432 = vstv %s404
      %v433 = vadd.s32 %v432, %v431
      %vm434 = vcmp.lt.s32.totalorder %v433, 4
      %v435 = vld [vmem:[#allocation2] sm:$0x1]
      %v436 = vsel %vm434, %v402, 0.0
      %vm437 = vcmask 27648
      %v438 = vsel %vm437, %v436, 0.0
      %439 = vadd.xlane.f32.xlu0 %v438
      %v440 = vpop.xlane.xlu0 %439
      %v441 = vrot.slane %v440, 4
      %v442 = vadd.f32 %v440, %v441
      %v443 = vrot.slane %v442, 2
      %v444 = vadd.f32 %v442, %v443
      %v445 = vrot.slane %v444, 1
      %v446 = vadd.f32 %v444, %v445
      %s447 = vtos %v446
      %v448 = vstv %s447
      %v449 = vadd.f32 %v435, %v448
      %vm450 = vcmask 0
      %451 = vst.msk [vmem:[#allocation2] sm:$0x1] %vm450, %v449
    $region25: #{tpu_custom_call.1} parent=1 // pred_fallthru
      _
    // Predicated region
    $region26: #{tpu_custom_call.1} parent=1 // pred_check
      _
    $region27: #{tpu_custom_call.1} parent=1 // pred_check_branch
      %453 = sbr.rel (0) target = $region29
    $region28: #{tpu_custom_call.1} parent=1 // pred_region
      %s455 = ssub.s32 16, 16
      %456 = vsyncadd [#allocation3], %s455
      %s458 = sshll.u32 [#allocation2], 4
      %s459 = int_to_ptr.vmem [resolvable:$true] %s458
      %461 = dma.vmem_to_hbm [thread:$0]  %s459, 16, %s3, [#allocation3]
    $region29: #{tpu_custom_call.1} parent=1 // pred_fallthru
      _
    // Predicated region
    $region30: #{tpu_custom_call.1} parent=1 // pred_check
      _
    $region31: #{tpu_custom_call.1} parent=1 // pred_check_branch
      %463 = sbr.rel (0) target = $region33
    $region32: #{tpu_custom_call.1} parent=1 // pred_region
      %464 = dma.done [#allocation3], 16
    $region33: #{tpu_custom_call.1} parent=1 // pred_fallthru
      _
    %465 = vsyncpa [#allocation3], 1

</llo_original>
